<compile_context>
chip_gen: v7x
topology: tpu7x:2x2x1
jax: 0.10.0
libtpu: 0.0.40
codegen_flags: <defaults>
</compile_context>

<pallas_src>
import jax
import jax.numpy as jnp
from jax.experimental import pallas as pl
from jax.experimental.pallas import tpu as pltpu


_LANE = 128


def _binarizer_kernel(x_ref, o_ref):
    # block: (1, C, S_TILE, 128) — channel axis (=1) is a leading dim.
    x = x_ref[...].astype(jnp.float32)
    m = jnp.max(x, axis=1, keepdims=True)      # stable softmax
    e = jnp.exp(x - m)
    s = jnp.sum(e, axis=1, keepdims=True)
    # round(e/s) == 1  iff  e/s > 0.5 (half-to-even tie at exactly 0.5 -> 0),
    # i.e. 2*e > s.  Avoids reciprocal + multi-op round on the VPU path.
    o_ref[...] = (2.0 * e > s).astype(o_ref.dtype)


def _round_up(x: int, m: int) -> int:
    return ((x + m - 1) // m) * m


def _choose_s_tile(c: int, s: int, target_block_bytes: int = 2 << 20) -> int:
    """Pick a sublane tile so each (1, C, T, 128) f32 block is ~<=2 MiB.

    ~2 MiB/block -> ~8 MiB with in+out double-buffering: safe on v5e's 16 MiB
    default scoped VMEM, v6e's 32 MiB, and v7x's 64 MiB physical VMEM.
    """
    bytes_per_sublane_row = c * _LANE * 4      # f32 compute copy, all channels
    t = max(1, target_block_bytes // bytes_per_sublane_row)
    if t >= s:
        return s                               # full extent: always legal
    t = max(8, (t // 8) * 8)                   # partial block: multiple of 8
    return min(t, s)


def binarizer(x_nchw: jax.Array) -> jax.Array:
    """Forward of Binarizer: round(softmax over channel dim). NCHW in/out."""
    n, c, h, w = x_nchw.shape
    hw = h * w
    out_dtype = x_nchw.dtype

    # Lane-dense layout: pad flattened spatial to a multiple of 128 and fold
    # into (N, C, S, 128).  Padding (zeros) is finite and per-position, so it
    # cannot affect valid columns; it is sliced off after the kernel.
    hw_pad = _round_up(hw, _LANE)
    s_total = hw_pad // _LANE
    s_tile = _choose_s_tile(c, s_total)
    s_pad = _round_up(s_total, s_tile)

    x3 = x_nchw.reshape(n, c, hw)
    pad = s_pad * _LANE - hw
    if pad:
        x3 = jnp.pad(x3, ((0, 0), (0, 0), (0, pad)))
    x4 = x3.reshape(n, c, s_pad, _LANE)

    grid = (n, s_pad // s_tile)

    out4 = pl.pallas_call(
        _binarizer_kernel,
        out_shape=jax.ShapeDtypeStruct((n, c, s_pad, _LANE), out_dtype),
        grid_spec=pltpu.PrefetchScalarGridSpec(
            num_scalar_prefetch=0,
            grid=grid,
            in_specs=[pl.BlockSpec((1, c, s_tile, _LANE),
                                   lambda i, j: (i, 0, j, 0))],
            out_specs=pl.BlockSpec((1, c, s_tile, _LANE),
                                   lambda i, j: (i, 0, j, 0)),
        ),
        compiler_params=pltpu.CompilerParams(
            dimension_semantics=("parallel", "parallel"),
        ),
    )(x4)

    out3 = out4.reshape(n, c, s_pad * _LANE)[:, :, :hw]
    return out3.reshape(n, c, h, w)


def binarizer_ref(x_nchw: jax.Array) -> jax.Array:
    """Pure-JAX reference (softmax over channel dim, then round)."""
    p = jax.nn.softmax(x_nchw.astype(jnp.float32), axis=1)
    return jnp.round(p).astype(x_nchw.dtype)


if __name__ == "__main__":
    key = jax.random.PRNGKey(0)
    # small NCHW input consistent with Softmax2d
    x = jax.random.normal(key, (2, 4, 16, 16), dtype=jnp.float32)

    out = binarizer(x)
    out = jax.block_until_ready(out)

    ref = binarizer_ref(x)
    assert out.shape == (2, 4, 16, 16)
    assert out.dtype == x.dtype
    assert bool(jnp.all(out == ref)), "Pallas output mismatch vs reference"

    print("KERNEL_OK")
</pallas_src>

<mosaic_0001>
module attributes {stable_mosaic.version = 11 : i64} {
  func.func @_binarizer_kernel(%arg0: i32, %arg1: i32, %arg2: memref<1x4x2x128xf32, #tpu.memory_space<vmem>>, %arg3: memref<1x4x2x128xf32, #tpu.memory_space<vmem>>) attributes {dimension_semantics = [#tpu.dimension_semantics<parallel>, #tpu.dimension_semantics<parallel>], iteration_bounds = array<i64: 2, 1>, scalar_prefetch = 0 : i64, scratch_operands = 0 : i64, tpu.core_type = #tpu.core_type<tc>, window_params = [{transform_indices = @transform_0, window_bounds = array<i64: 1, 4, 2, 128>}, {transform_indices = @transform_1, window_bounds = array<i64: 1, 4, 2, 128>}]} {
    %c0 = arith.constant 0 : index
    %c0_0 = arith.constant 0 : index
    %c0_1 = arith.constant 0 : index
    %c0_2 = arith.constant 0 : index
    %0 = vector.load %arg2[%c0, %c0_0, %c0_1, %c0_2] : memref<1x4x2x128xf32, #tpu.memory_space<vmem>>, vector<1x4x2x128xf32>
    %cst = arith.constant dense<0xFF800000> : vector<1x2x128xf32>
    %1 = vector.multi_reduction <maximumf>, %0, %cst [1] : vector<1x4x2x128xf32> to vector<1x2x128xf32>
    %2 = vector.shape_cast %1 : vector<1x2x128xf32> to vector<1x1x2x128xf32>
    %3 = vector.broadcast %2 : vector<1x1x2x128xf32> to vector<1x4x2x128xf32>
    %4 = arith.subf %0, %3 : vector<1x4x2x128xf32>
    %5 = math.exp %4 : vector<1x4x2x128xf32>
    %cst_3 = arith.constant dense<0.000000e+00> : vector<1x2x128xf32>
    %6 = vector.multi_reduction <add>, %5, %cst_3 [1] : vector<1x4x2x128xf32> to vector<1x2x128xf32>
    %7 = vector.shape_cast %6 : vector<1x2x128xf32> to vector<1x1x2x128xf32>
    %cst_4 = arith.constant 2.000000e+00 : f32
    %8 = vector.broadcast %cst_4 : f32 to vector<1x4x2x128xf32>
    %9 = arith.mulf %8, %5 : vector<1x4x2x128xf32>
    %10 = vector.broadcast %7 : vector<1x1x2x128xf32> to vector<1x4x2x128xf32>
    %11 = arith.cmpf ogt, %9, %10 : vector<1x4x2x128xf32>
    %12 = arith.extui %11 : vector<1x4x2x128xi1> to vector<1x4x2x128xi32>
    %13 = arith.sitofp %12 : vector<1x4x2x128xi32> to vector<1x4x2x128xf32>
    %c0_5 = arith.constant 0 : index
    %c0_6 = arith.constant 0 : index
    %c0_7 = arith.constant 0 : index
    %c0_8 = arith.constant 0 : index
    %14 = vector.load %arg3[%c0_5, %c0_6, %c0_7, %c0_8] : memref<1x4x2x128xf32, #tpu.memory_space<vmem>>, vector<1x4x2x128xf32>
    tpu.vector_store %arg3[%c0_5, %c0_6, %c0_7, %c0_8], %13 {strides = array<i32>} : memref<1x4x2x128xf32, #tpu.memory_space<vmem>>, vector<1x4x2x128xf32>,
    return
  }
  func.func @transform_0(%arg0: i32, %arg1: i32) -> (i32, i32, i32, i32) {
    %c0_i32 = arith.constant 0 : i32
    %c0_i32_0 = arith.constant 0 : i32
    %c0_i32_1 = arith.constant 0 : i32
    return %arg0, %c0_i32, %arg1, %c0_i32_0 : i32, i32, i32, i32
  }
  func.func @transform_1(%arg0: i32, %arg1: i32) -> (i32, i32, i32, i32) {
    %c0_i32 = arith.constant 0 : i32
    %c0_i32_0 = arith.constant 0 : i32
    %c0_i32_1 = arith.constant 0 : i32
    return %arg0, %c0_i32, %arg1, %c0_i32_0 : i32, i32, i32, i32
  }
}

</mosaic_0001>

<llo_original>
// kernel: tpu_custom_call.1
$region0: #{tpu_custom_call.1}
  #allocation0 [shape = 'u32[]', space=smem, size = 0x4, offset = 0x4, fixed_abs, tag = 'smem constant byte address 0x4 - core index']
  #allocation1 [shape = 'u32[144,128]{1,0:T(1,128)}', space=vmem, size = 0x12000, scoped, tag = 'internal scratch']
  %s0 = inlined_call_operand.hbm [shape: f32[2,4,2,128], index: 0, kind: input, shape index: {}]
  %s1 = inlined_call_operand.hbm [shape: f32[2,4,2,128], index: 1, kind: output, shape index: {}]
  %s2 = sld [smem:[#allocation0]]
  $region41: #{tpu_custom_call.1} parent=0
    _
  %s4 = ssub.s32 1, %s2
  %s5 = scalar_select 0, %s4, %s2
  $region1: #{tpu_custom_call.1} parent=0
    #allocation2 [shape = 'u8[8192]{0}', space=vmem, size = 0x2000, scoped, tag = 'input window, operand 0']
    #allocation3 [shape = 's32[2]{0}', space=sflag, size = 0x8, scoped, tag = 'scoped memory for tpu_custom_call.1']
    #allocation4 [shape = 's32[2]{0}', space=sflag, size = 0x8, scoped, tag = 'scoped memory for tpu_custom_call.1']
    #allocation5 [shape = 'u8[8192]{0}', space=vmem, size = 0x2000, scoped, tag = 'output window, operand 0']
    %6 = vsyncpa [#allocation3], 0
    %s7 = scalar_lea.sflag [#allocation3], 1
    %8 = vsyncpa %s7, 0
    %9 = vsyncpa [#allocation4], 0
    %s10 = scalar_lea.sflag [#allocation4], 1
    %11 = vsyncpa %s10, 0
    loop: start=0, step=1, limit=4
    $region2: #{tpu_custom_call.1} parent=1 // loop_pre_header
      _
    $region3: #{tpu_custom_call.1} parent=1 // loop_header
      %s13 = sphi 0, %s17
      %p14 = scmp.ge.s32.totalorder %s13, 4
      %s20 = sphi 0, %s32
      %s21 = sphi 0, %s28
      %s22 = sphi 0, %s20
      %s23 = sphi 0, %s21
      %s24 = sphi 0, %s22
      %s25 = sphi 0, %s23
      %s37 = sphi 0, %s39
      %s40 = sphi 0, %s37
      %s41 = sphi 0, %s40
      %s57 = sphi 0, %s41
      %s65 = sphi 0, %s67
      %s68 = sphi 0, %s65
      %s69 = sphi 0, %s68
      %s85 = sphi 0, %s69
    $region4: #{tpu_custom_call.1} parent=1 // loop_header_branch
      %16 = sbr.rel (%p14) target = $region8
    $region5: #{tpu_custom_call.1} parent=1 // loop_body
      %s18 = ssub.s32 %s13, 1
      %s19 = ssub.s32 %s13, 2
      %s26 = sadd.s32 1, %s21
      %p27 = scmp.ge.s32.totalorder %s26, 1
      %s28 = scalar_select %p27, 0, %s26
      %s29 = sadd.s32 1, %s20
      %s30 = scalar_select %p27, %s29, %s20
      %p31 = scmp.ge.s32.totalorder %s30, 2
      %s32 = scalar_select %p31, 0, %s30
      %s33 = ssub.s32 %s20, %s32
      %s34 = ssub.s32 %s21, %s28
      %s35 = sor.u32 %s33, %s34
      %p36 = scmp.eq.s32.totalorder %s35, 0
      %s38 = sadd.s32 %s37, 1
      %s39 = scalar_select %p36, %s37, %s38
      %p42 = pneg %p36
      %p43 = scmp.eq.s32.totalorder %s13, 1
      %p44 = por %p42, %p43
      %p45 = scmp.ne.s32.totalorder %s37, %s40
      %p46 = scmp.eq.s32.totalorder %s13, 0
      %p47 = por %p45, %p46
      %p48 = scmp.ne.s32.totalorder %s37, %s40
      %p49 = scmp.eq.s32.totalorder %s18, 1
      %p50 = por %p48, %p49
      %p51 = scmp.ne.s32.totalorder %s40, %s41
      %p52 = scmp.eq.s32.totalorder %s18, 0
      %p53 = por %p51, %p52
      %p54 = scmp.ne.s32.totalorder %s40, %s41
      %p55 = scmp.eq.s32.totalorder %s19, 1
      %p56 = por %p54, %p55
      %p58 = scmp.ne.s32.totalorder %s41, %s57
      %p59 = scmp.eq.s32.totalorder %s19, 0
      %p60 = por %p58, %p59
      %s61 = ssub.s32 %s20, %s32
      %s62 = ssub.s32 %s21, %s28
      %s63 = sor.u32 %s61, %s62
      %p64 = scmp.eq.s32.totalorder %s63, 0
      %s66 = sadd.s32 %s65, 1
      %s67 = scalar_select %p64, %s65, %s66
      %p70 = pneg %p64
      %p71 = scmp.eq.s32.totalorder %s13, 1
      %p72 = por %p70, %p71
      %p73 = scmp.ne.s32.totalorder %s65, %s68
      %p74 = scmp.eq.s32.totalorder %s13, 0
      %p75 = por %p73, %p74
      %p76 = scmp.ne.s32.totalorder %s65, %s68
      %p77 = scmp.eq.s32.totalorder %s18, 1
      %p78 = por %p76, %p77
      %p79 = scmp.ne.s32.totalorder %s68, %s69
      %p80 = scmp.eq.s32.totalorder %s18, 0
      %p81 = por %p79, %p80
      %p82 = scmp.ne.s32.totalorder %s68, %s69
      %p83 = scmp.eq.s32.totalorder %s19, 1
      %p84 = por %p82, %p83
      %p86 = scmp.ne.s32.totalorder %s69, %s85
      %p87 = scmp.eq.s32.totalorder %s19, 0
      %p88 = por %p86, %p87
      %p89 = scmp.le.s32.totalorder 1, %s13
      %p90 = scmp.lt.s32.totalorder %s13, 3
      %p91 = pnand %p89, %p90
      %p92 = pneg %p91
      // Predicated region
      $region9: #{tpu_custom_call.1} parent=5 // pred_check
        _
      $region10: #{tpu_custom_call.1} parent=5 // pred_check_branch
        %94 = sbr.rel (%p91) target = $region12
      $region11: #{tpu_custom_call.1} parent=5 // pred_region
        %s95 = ssub.s32 %s13, 1
      $region12: #{tpu_custom_call.1} parent=5 // pred_fallthru
        _
      %p96 = scmp.lt.s32.totalorder %s13, 2
      // Predicated region
      $region13: #{tpu_custom_call.1} parent=5 // pred_check
        %p97 = pneg %p96
      $region14: #{tpu_custom_call.1} parent=5 // pred_check_branch
        %99 = sbr.rel (%p97) target = $region16
      $region15: #{tpu_custom_call.1} parent=5 // pred_region
        // Predicated region
        $region17: #{tpu_custom_call.1} parent=15 // pred_check
          %p100 = pneg %p47
        $region18: #{tpu_custom_call.1} parent=15 // pred_check_branch
          %102 = sbr.rel (%p100) target = $region20
        $region19: #{tpu_custom_call.1} parent=15 // pred_region
          %s103 = sand.u32 %s37, 1
          %s104 = scalar_lea.sflag [#allocation3], %s103
          %s105 = sand.u32 %s37, 1
          %s106 = smul.addr %s105, 8
          %s107 = scalar_lea.vmem [#allocation2], %s106
          %s109 = ssub.s32 128, 128
          %110 = vsyncadd %s104, %s109
          %s111 = smul.addr %s20, 4
          %s112 = sadd.s32 %s21, %s111
          %s113 = smul.addr %s112, 32
          %s114 = scalar_lea.hbm %s0, %s113
          %s115 = sshll.u32 %s107, 4
          %s116 = int_to_ptr.vmem [resolvable:$true] %s115
          %121 = dma.hbm_to_vmem [thread:$0]  %s114, 128, %s116, %s104, 32, 32, 2
        $region20: #{tpu_custom_call.1} parent=15 // pred_fallthru
          _
      $region16: #{tpu_custom_call.1} parent=5 // pred_fallthru
        _
      %p122 = scmp.le.s32.totalorder 1, %s13
      %p123 = scmp.lt.s32.totalorder %s13, 3
      %p124 = pnand %p122, %p123
      %p125 = pneg %p124
      // Predicated region
      $region21: #{tpu_custom_call.1} parent=5 // pred_check
        _
      $region22: #{tpu_custom_call.1} parent=5 // pred_check_branch
        %127 = sbr.rel (%p124) target = $region24
      $region23: #{tpu_custom_call.1} parent=5 // pred_region
        %s128 = ssub.s32 %s13, 1
        %s129 = sand.u32 %s40, 1
        %s130 = scalar_lea.sflag [#allocation3], %s129
        %s131 = sand.u32 %s40, 1
        %s132 = smul.addr %s131, 8
        %s133 = scalar_lea.vmem [#allocation2], %s132
        // Predicated region
        $region25: #{tpu_custom_call.1} parent=23 // pred_check
          %p134 = pneg %p53
        $region26: #{tpu_custom_call.1} parent=23 // pred_check_branch
          %136 = sbr.rel (%p134) target = $region28
        $region27: #{tpu_custom_call.1} parent=23 // pred_region
          %137 = dma.done %s130, 128
        $region28: #{tpu_custom_call.1} parent=23 // pred_fallthru
          _
        %s138 = sand.u32 %s40, 1
        %s139 = scalar_lea.sflag [#allocation3], %s138
        %s140 = sand.u32 %s40, 1
        %s141 = smul.addr %s140, 8
        %s142 = scalar_lea.vmem [#allocation2], %s141
        %p143 = pneg %p53
        %p144 = pneg %p50
        %p145 = pneg %p81
        %p146 = pneg %p78
        %s147 = sand.u32 %s68, 1
        %s148 = scalar_lea.sflag [#allocation4], %s147
        %s149 = sand.u32 %s68, 1
        %s150 = smul.addr %s149, 8
        %s151 = scalar_lea.vmem [#allocation5], %s150
        %v152 = vld [vmem:[%s133] sm:$0x3]
        %v153 = vld [vmem:[%s133 + $0x2] sm:$0x3]
        %v154 = vld [vmem:[%s133 + $0x4] sm:$0x3]
        %v155 = vld [vmem:[%s133 + $0x6] sm:$0x3]
        %vm156 = vcmask 1041408
        %v157 = vsel %vm156, %v152, -inf
        %v158 = vsel %vm156, %v153, -inf
        %v159 = vsel %vm156, %v154, -inf
        %v160 = vsel %vm156, %v155, -inf
        %v161 = vmax.f32 %v157, %v158
        %v162 = vmax.f32 %v159, %v160
        %v163 = vmax.f32 %v161, %v162
        %v164 = vsub.f32 %v152, %v163
        %v165 = vsub.f32 %v153, %v163
        %v166 = vsub.f32 %v154, %v163
        %v167 = vsub.f32 %v155, %v163
        %v168 = vmul.f32 %v164, 1.442695
        %v169 = vpow.pop %v168
        %v170 = vmul.f32 %v165, 1.442695
        %v171 = vpow.pop %v170
        %v172 = vmul.f32 %v166, 1.442695
        %v173 = vpow.pop %v172
        %v174 = vmul.f32 %v167, 1.442695
        %v175 = vpow.pop %v174
        %v176 = vsel %vm156, %v169, 0.0
        %v177 = vsel %vm156, %v171, 0.0
        %v178 = vadd.f32 %v176, %v177
        %v179 = vsel %vm156, %v173, 0.0
        %v180 = vadd.f32 %v178, %v179
        %v181 = vsel %vm156, %v175, 0.0
        %v182 = vadd.f32 %v180, %v181
        %v183 = vmul.f32 %v169, 2.0
        %v184 = vmul.f32 %v171, 2.0
        %v185 = vmul.f32 %v173, 2.0
        %v186 = vmul.f32 %v175, 2.0
        %vm187 = vcmp.gt.f32.partialorder %v183, %v182
        %vm188 = vcmp.gt.f32.partialorder %v184, %v182
        %vm189 = vcmp.gt.f32.partialorder %v185, %v182
        %vm190 = vcmp.gt.f32.partialorder %v186, %v182
        %v191 = vsel %vm187, 1, 0
        %v192 = vsel %vm188, 1, 0
        %v193 = vsel %vm189, 1, 0
        %v194 = vsel %vm190, 1, 0
        %v195 = vcvt.s32.f32 %v191
        %v196 = vcvt.s32.f32 %v192
        %v197 = vcvt.s32.f32 %v193
        %v198 = vcvt.s32.f32 %v194
        %199 = vst [vmem:[%s151] sm:$0x3] %v195
        %200 = vst [vmem:[%s151 + $0x2] sm:$0x3] %v196
        %201 = vst [vmem:[%s151 + $0x4] sm:$0x3] %v197
        %202 = vst [vmem:[%s151 + $0x6] sm:$0x3] %v198
        %s203 = sand.u32 %s68, 1
        %s204 = scalar_lea.sflag [#allocation4], %s203
        %s205 = sand.u32 %s68, 1
        %s206 = smul.addr %s205, 8
        %s207 = scalar_lea.vmem [#allocation5], %s206
        // Predicated region
        $region29: #{tpu_custom_call.1} parent=23 // pred_check
          %p208 = pneg %p78
        $region30: #{tpu_custom_call.1} parent=23 // pred_check_branch
          %210 = sbr.rel (%p208) target = $region32
        $region31: #{tpu_custom_call.1} parent=23 // pred_region
          %s212 = ssub.s32 128, 128
          %213 = vsyncadd %s204, %s212
          %s214 = smul.addr %s22, 4
          %s215 = sadd.s32 %s23, %s214
          %s216 = smul.addr %s215, 32
          %s217 = scalar_lea.hbm %s1, %s216
          %s218 = sshll.u32 %s207, 4
          %s219 = int_to_ptr.vmem [resolvable:$true] %s218
          %224 = dma.vmem_to_hbm [thread:$0]  %s219, 128, %s217, %s204, 32, 32, 2
        $region32: #{tpu_custom_call.1} parent=23 // pred_fallthru
          _
      $region24: #{tpu_custom_call.1} parent=5 // pred_fallthru
        _
      %p225 = scmp.le.s32.totalorder 2, %s13
      // Predicated region
      $region33: #{tpu_custom_call.1} parent=5 // pred_check
        %p226 = pneg %p225
      $region34: #{tpu_custom_call.1} parent=5 // pred_check_branch
        %228 = sbr.rel (%p226) target = $region36
      $region35: #{tpu_custom_call.1} parent=5 // pred_region
        %s229 = ssub.s32 %s13, 2
        // Predicated region
        $region37: #{tpu_custom_call.1} parent=35 // pred_check
          %p230 = pneg %p84
        $region38: #{tpu_custom_call.1} parent=35 // pred_check_branch
          %232 = sbr.rel (%p230) target = $region40
        $region39: #{tpu_custom_call.1} parent=35 // pred_region
          %s233 = sand.u32 %s69, 1
          %s234 = scalar_lea.sflag [#allocation4], %s233
          %s235 = sand.u32 %s69, 1
          %s236 = smul.addr %s235, 8
          %s237 = scalar_lea.vmem [#allocation5], %s236
          %238 = dma.done %s234, 128
        $region40: #{tpu_custom_call.1} parent=35 // pred_fallthru
          _
      $region36: #{tpu_custom_call.1} parent=5 // pred_fallthru
        _
    $region6: #{tpu_custom_call.1} parent=1 // loop_footer
      %s17 = sadd.s32 1, %s13
    $region7: #{tpu_custom_call.1} parent=1 // loop_footer_branch
      %12 = sbr.rel target = $region3
    $region8: #{tpu_custom_call.1} parent=1 // loop_exit
      _
    %239 = vsyncpa [#allocation3], 1
    %s240 = scalar_lea.sflag [#allocation3], 1
    %241 = vsyncpa %s240, 1
    %242 = vsyncpa [#allocation4], 1
    %s243 = scalar_lea.sflag [#allocation4], 1
    %244 = vsyncpa %s243, 1

</llo_original>
